<compile_context>
chip_gen: v7x
topology: tpu7x:2x2x1
jax: 0.10.0
libtpu: 0.0.40
codegen_flags: <defaults>
</compile_context>

<pallas_src>
import functools

import jax
import jax.numpy as jnp
from jax.experimental import pallas as pl
from jax.experimental.pallas import tpu as pltpu


# ----------------------------------------------------------------------------
# Pallas kernel: 3x3 conv (stride 1, pad 1), one batch item per grid step.
# ----------------------------------------------------------------------------
def _conv3x3_kernel(x_ref, w_ref, b_ref, o_ref, *, H, W, Cin, Cout, act):
    x = x_ref[0]                                           # (H, W, Cin) f32
    # Build the zero halo in VMEM (no HBM pre-pad of the activation).
    zc = jnp.zeros((H, 1, Cin), jnp.float32)
    zr = jnp.zeros((1, W + 2, Cin), jnp.float32)
    xp = jnp.concatenate(
        [zr, jnp.concatenate([zc, x, zc], axis=1), zr], axis=0)  # (H+2,W+2,Cin)

    # im2col, tap-major (dy, dx, c) -> matches w.reshape(9*Cin, Cout).
    # One K = 9*Cin MXU matmul instead of nine K = Cin matmuls.
    slabs = [xp[dy:dy + H, dx:dx + W, :].reshape(H * W, Cin)
             for dy in range(3) for dx in range(3)]
    cols = jnp.concatenate(slabs, axis=1).astype(jnp.bfloat16)   # (H*W, 9*Cin)

    acc = jnp.dot(cols, w_ref[...], preferred_element_type=jnp.float32)
    acc = acc + b_ref[0, :][None, :]
    if act == "lrelu":
        acc = jnp.where(acc >= 0, acc, 0.1 * acc)
    # TODO(synk): Cout < 128 keeps this a masked store; a lane-dense
    # (H, W*Cout) slab would need an in-kernel relayout costing as much here.
    o_ref[0] = acc


def conv3x3(x, w, b, act=None):
    """x: (B,H,W,Cin) f32, w: (3,3,Cin,Cout) HWIO f32, b: (Cout,) f32."""
    B, H, W, Cin = x.shape
    Cout = w.shape[-1]
    w_flat = w.reshape(9 * Cin, Cout).astype(jnp.bfloat16)
    kernel = functools.partial(_conv3x3_kernel, H=H, W=W, Cin=Cin, Cout=Cout,
                               act=act)
    out = pl.pallas_call(
        kernel,
        out_shape=jax.ShapeDtypeStruct((B, H * W, Cout), jnp.float32),
        grid=(B,),
        in_specs=[
            pl.BlockSpec((1, H, W, Cin), lambda n: (n, 0, 0, 0)),
            pl.BlockSpec((9 * Cin, Cout), lambda n: (0, 0)),
            pl.BlockSpec((1, Cout), lambda n: (0, 0)),
        ],
        out_specs=pl.BlockSpec((1, H * W, Cout), lambda n: (n, 0, 0)),
        # TODO(synk): at realistic EDVR sizes (C=64, H,W>=128) add a spatial
        # row-tile grid axis + vmem_limit_bytes so blocks stay a few MiB and
        # both v7x TensorCores get work.
        compiler_params=pltpu.CompilerParams(
            dimension_semantics=("parallel",)),
    )(x, w_flat, b.reshape(1, Cout))
    return out.reshape(B, H, W, Cout)


# ----------------------------------------------------------------------------
# Pallas kernel: fused modulated deformable conv v2 (stride 1, pad 1, dil 1,
# groups=1).  One batch item per grid step.
# ----------------------------------------------------------------------------
def _dcn_kernel(x_ref, offy_ref, offx_ref, mlog_ref, w_ref, b_ref, o_ref,
                *, H, W, C, Cout, dg, act):
    HW = H * W
    K9 = 9 * dg

    xf = x_ref[0]                                          # (HW, C) f32
    offy = offy_ref[0]                                     # (HW, 9*dg) f32
    offx = offx_ref[0]
    mask = 1.0 / (1.0 + jnp.exp(-mlog_ref[0]))             # fused sigmoid (EUP)

    # Channel contraction first against a block-diagonal weight:
    #   y_all[q, j*Cout + o] = sum_c x[q, g*cpg+c] * W[ky,kx,g*cpg+c,o],
    # with j = g*9 + k.  One MXU matmul.
    y_all = jnp.dot(xf.astype(jnp.bfloat16), w_ref[...],
                    preferred_element_type=jnp.float32)
    y_all = y_all.astype(jnp.bfloat16)                     # (HW, dg*9*Cout)

    # Sampling positions, vectorized over the (g, k) lane axis.
    p_f = jax.lax.broadcasted_iota(jnp.int32, (HW, 1), 0).astype(jnp.float32)
    hh = jnp.floor(p_f / W)
    ww = p_f - hh * W
    j_f = jax.lax.broadcasted_iota(jnp.int32, (1, K9), 1).astype(jnp.float32)
    k_f = j_f - 9.0 * jnp.floor(j_f / 9.0)                 # tap index k
    ky = jnp.floor(k_f / 3.0) - 1.0
    kx = k_f - 3.0 * jnp.floor(k_f / 3.0) - 1.0

    py = hh + ky + offy                                    # (HW, 9*dg)
    px = ww + kx + offx
    y0 = jnp.floor(py)
    x0 = jnp.floor(px)
    ly = py - y0
    lx = px - x0

    # Per-corner bilinear weights (modulation mask + mmcv-style per-corner
    # boundary zeroing folded in) and flat source indices.
    corners = []
    for cy in (0.0, 1.0):
        for cx in (0.0, 1.0):
            yc = y0 + cy
            xc = x0 + cx
            wy = ly if cy == 1.0 else 1.0 - ly
            wx = lx if cx == 1.0 else 1.0 - lx
            valid = ((yc >= 0.0) & (yc <= H - 1.0) &
                     (xc >= 0.0) & (xc <= W - 1.0))
            wgt = jnp.where(valid, wy * wx * mask, 0.0)    # (HW, 9*dg)
            corners.append((wgt, yc * W + xc))

    q_f = jax.lax.broadcasted_iota(jnp.int32, (1, HW), 1).astype(jnp.float32)
    acc = jnp.zeros((HW, Cout), jnp.float32)
    # TODO(synk): the (HW, HW) one-hot interpolation matrix scales
    # quadratically with spatial size; large H*W needs a row-tiled grid axis
    # (or an in-kernel gather) instead.
    for j in range(K9):
        s = jnp.zeros((HW, HW), jnp.float32)
        for wgt, flat in corners:
            hit = (q_f == flat[:, j:j + 1]).astype(jnp.float32)   # (HW, HW)
            s = s + wgt[:, j:j + 1] * hit
        acc = acc + jnp.dot(s.astype(jnp.bfloat16),
                            y_all[:, j * Cout:(j + 1) * Cout],
                            preferred_element_type=jnp.float32)

    acc = acc + b_ref[0, :][None, :]
    if act == "lrelu":
        acc = jnp.where(acc >= 0, acc, 0.1 * acc)
    o_ref[0] = acc


def dcn_v2_pack(x, offset_feat, p, dg, act=None):
    """DCNv2Pack: offsets/mask come from `offset_feat`, sampling from `x`."""
    B, H, W, C = x.shape
    HW = H * W
    Cout = p["w"].shape[-1]
    cpg = C // dg

    # conv_offset_mask -> raw (o1 | o2 | mask-logit) channels.
    om = conv3x3(offset_feat, p["om"]["w"], p["om"]["b"], act=None)
    om = om.reshape(B, HW, 3 * dg * 9)
    # torch.chunk(out,3)+cat((o1,o2)) is the identity on the first 2/3 of the
    # channels: per (g, k) the y-offset is channel 2*(g*9+k), the x-offset is
    # channel 2*(g*9+k)+1, the mask logit is channel 18*dg + g*9 + k.
    off_y = om[..., 0:18 * dg:2]
    off_x = om[..., 1:18 * dg:2]
    mlog = om[..., 18 * dg:]

    # Reorder the small conv weight once (tap-major, per deform group) into a
    # block-diagonal (C, dg*9*Cout) matrix instead of relayouting the big
    # sampled activations: w_bd[g*cpg+c, (g*9+k)*Cout+o] = w[ky,kx,g*cpg+c,o].
    wt = jnp.transpose(p["w"].reshape(3, 3, dg, cpg, Cout),
                       (2, 3, 0, 1, 4)).reshape(dg, cpg, 9 * Cout)
    w_bd = jnp.zeros((C, dg * 9 * Cout), jnp.float32)
    for g in range(dg):
        w_bd = w_bd.at[g * cpg:(g + 1) * cpg,
                       g * 9 * Cout:(g + 1) * 9 * Cout].set(wt[g])
    w_bd = w_bd.astype(jnp.bfloat16)

    kernel = functools.partial(_dcn_kernel, H=H, W=W, C=C, Cout=Cout, dg=dg,
                               act=act)
    out = pl.pallas_call(
        kernel,
        out_shape=jax.ShapeDtypeStruct((B, HW, Cout), jnp.float32),
        grid=(B,),
        in_specs=[
            pl.BlockSpec((1, HW, C), lambda n: (n, 0, 0)),
            pl.BlockSpec((1, HW, 9 * dg), lambda n: (n, 0, 0)),
            pl.BlockSpec((1, HW, 9 * dg), lambda n: (n, 0, 0)),
            pl.BlockSpec((1, HW, 9 * dg), lambda n: (n, 0, 0)),
            pl.BlockSpec((C, dg * 9 * Cout), lambda n: (0, 0)),
            pl.BlockSpec((1, Cout), lambda n: (0, 0)),
        ],
        out_specs=pl.BlockSpec((1, HW, Cout), lambda n: (n, 0, 0)),
        compiler_params=pltpu.CompilerParams(
            dimension_semantics=("parallel",)),
    )(x.reshape(B, HW, C), off_y, off_x, mlog, w_bd, p["b"].reshape(1, Cout))
    return out.reshape(B, H, W, Cout)


# ----------------------------------------------------------------------------
# Bilinear 2x upsample, align_corners=False (half-pixel centers).  Glue.
# ----------------------------------------------------------------------------
def upsample2x(x):
    # TODO(synk): jax.image.resize bilinear is close to but not guaranteed
    # bit-identical to F.interpolate(align_corners=False) at image borders.
    B, H, W, C = x.shape
    return jax.image.resize(x, (B, 2 * H, 2 * W, C), method="bilinear")


# ----------------------------------------------------------------------------
# Parameter init (deterministic, synthetic) and forward pass.
# ----------------------------------------------------------------------------
def init_params(key, num_feat, dg):
    counter = [0]

    def nk():
        counter[0] += 1
        return jax.random.fold_in(key, counter[0])

    def conv_p(cin, cout):
        return {"w": 0.05 * jax.random.normal(nk(), (3, 3, cin, cout),
                                              jnp.float32),
                "b": 0.02 * jax.random.normal(nk(), (cout,), jnp.float32)}

    def dcn_p(cin, cout):
        return {"om": conv_p(cin, dg * 3 * 9),   # conv_offset_mask
                "w": 0.05 * jax.random.normal(nk(), (3, 3, cin, cout),
                                              jnp.float32),
                "b": 0.02 * jax.random.normal(nk(), (cout,), jnp.float32)}

    C = num_feat
    params = {}
    for i in range(3, 0, -1):
        l = f"l{i}"
        params[f"offset_conv1_{l}"] = conv_p(2 * C, C)
        if i == 3:
            params[f"offset_conv2_{l}"] = conv_p(C, C)
        else:
            params[f"offset_conv2_{l}"] = conv_p(2 * C, C)
            params[f"offset_conv3_{l}"] = conv_p(C, C)
        params[f"dcn_{l}"] = dcn_p(C, C)
        if i < 3:
            params[f"feat_conv_{l}"] = conv_p(2 * C, C)
    params["cas_offset_conv1"] = conv_p(2 * C, C)
    params["cas_offset_conv2"] = conv_p(C, C)
    params["cas_dcn"] = dcn_p(C, C)
    return params


def pcd_alignment_forward(params, nbr_feat_l, ref_feat_l, dg):
    """nbr_feat_l / ref_feat_l: [L1, L2, L3] NHWC tensors."""
    upsampled_offset, upsampled_feat = None, None
    feat = None
    for i in range(3, 0, -1):
        l = f"l{i}"
        nbr = nbr_feat_l[i - 1]
        ref = ref_feat_l[i - 1]

        offset = jnp.concatenate([nbr, ref], axis=-1)
        p = params[f"offset_conv1_{l}"]
        offset = conv3x3(offset, p["w"], p["b"], act="lrelu")
        if i == 3:
            p = params[f"offset_conv2_{l}"]
            offset = conv3x3(offset, p["w"], p["b"], act="lrelu")
        else:
            p = params[f"offset_conv2_{l}"]
            offset = conv3x3(jnp.concatenate([offset, upsampled_offset], -1),
                             p["w"], p["b"], act="lrelu")
            p = params[f"offset_conv3_{l}"]
            offset = conv3x3(offset, p["w"], p["b"], act="lrelu")

        # LeakyReLU fuses into the DCN only when no feat_conv follows (i==3);
        # otherwise it fuses into the feat_conv (i==2) or is omitted (i==1).
        feat = dcn_v2_pack(nbr, offset, params[f"dcn_{l}"], dg,
                           act="lrelu" if i == 3 else None)
        if i < 3:
            p = params[f"feat_conv_{l}"]
            feat = conv3x3(jnp.concatenate([feat, upsampled_feat], -1),
                           p["w"], p["b"],
                           act="lrelu" if i > 1 else None)
        if i > 1:
            upsampled_offset = upsample2x(offset) * 2.0
            upsampled_feat = upsample2x(feat)

    # Cascading refinement.
    offset = jnp.concatenate([feat, ref_feat_l[0]], axis=-1)
    p = params["cas_offset_conv1"]
    offset = conv3x3(offset, p["w"], p["b"], act="lrelu")
    p = params["cas_offset_conv2"]
    offset = conv3x3(offset, p["w"], p["b"], act="lrelu")
    feat = dcn_v2_pack(feat, offset, params["cas_dcn"], dg, act="lrelu")
    return feat


# ----------------------------------------------------------------------------
# Demo
# ----------------------------------------------------------------------------
if __name__ == "__main__":
    num_feat = 16          # (reference default 64)
    deformable_groups = 4  # (reference default 8); num_feat % dg == 0
    B, H, W = 2, 16, 16

    params = init_params(jax.random.PRNGKey(1), num_feat, deformable_groups)

    key = jax.random.PRNGKey(0)
    ks = jax.random.split(key, 6)
    nbr_feat_l = [
        jax.random.normal(ks[0], (B, H, W, num_feat), jnp.float32),
        jax.random.normal(ks[1], (B, H // 2, W // 2, num_feat), jnp.float32),
        jax.random.normal(ks[2], (B, H // 4, W // 4, num_feat), jnp.float32),
    ]
    ref_feat_l = [
        jax.random.normal(ks[3], (B, H, W, num_feat), jnp.float32),
        jax.random.normal(ks[4], (B, H // 2, W // 2, num_feat), jnp.float32),
        jax.random.normal(ks[5], (B, H // 4, W // 4, num_feat), jnp.float32),
    ]

    out = pcd_alignment_forward(params, nbr_feat_l, ref_feat_l,
                                deformable_groups)
    out = jax.block_until_ready(out)
    assert out.shape == (B, H, W, num_feat), out.shape
    assert bool(jnp.all(jnp.isfinite(out)))
    print("KERNEL_OK")
</pallas_src>

<mosaic_0001>
module attributes {stable_mosaic.version = 11 : i64} {
  func.func @_conv3x3_kernel(%arg0: i32, %arg1: memref<1x4x4x32xf32, #tpu.memory_space<vmem>>, %arg2: memref<288x16xbf16, #tpu.memory_space<vmem>>, %arg3: memref<1x16xf32, #tpu.memory_space<vmem>>, %arg4: memref<1x16x16xf32, #tpu.memory_space<vmem>>) attributes {dimension_semantics = [#tpu.dimension_semantics<parallel>], iteration_bounds = array<i64: 2>, scalar_prefetch = 0 : i64, scratch_operands = 0 : i64, tpu.core_type = #tpu.core_type<tc>, window_params = [{transform_indices = @transform_0, window_bounds = array<i64: 1, 4, 4, 32>}, {pipeline_mode = #tpu.pipeline_mode<synchronous>, transform_indices = @transform_1, window_bounds = array<i64: 288, 16>}, {pipeline_mode = #tpu.pipeline_mode<synchronous>, transform_indices = @transform_2, window_bounds = array<i64: 1, 16>}, {transform_indices = @transform_3, window_bounds = array<i64: 1, 16, 16>}]} {
    %c0 = arith.constant 0 : index
    %c0_0 = arith.constant 0 : index
    %c0_1 = arith.constant 0 : index
    %c0_2 = arith.constant 0 : index
    %0 = vector.load %arg1[%c0, %c0_0, %c0_1, %c0_2] : memref<1x4x4x32xf32, #tpu.memory_space<vmem>>, vector<1x4x4x32xf32>
    %1 = vector.shape_cast %0 : vector<1x4x4x32xf32> to vector<4x4x32xf32>
    %cst = arith.constant 0.000000e+00 : f32
    %2 = vector.broadcast %cst : f32 to vector<4x1x32xf32>
    %cst_3 = arith.constant 0.000000e+00 : f32
    %3 = vector.broadcast %cst_3 : f32 to vector<1x6x32xf32>
    %4 = tpu.concatenate %2, %1, %2 in 1 : vector<4x1x32xf32>, vector<4x4x32xf32>, vector<4x1x32xf32> -> vector<4x6x32xf32>
    %5 = tpu.concatenate %3, %4, %3 in 0 : vector<1x6x32xf32>, vector<4x6x32xf32>, vector<1x6x32xf32> -> vector<6x6x32xf32>
    %6 = vector.extract_strided_slice %5 {offsets = [0, 0, 0], sizes = [4, 4, 32], strides = [1, 1, 1]} : vector<6x6x32xf32> to vector<4x4x32xf32>
    %7 = vector.shape_cast %6 : vector<4x4x32xf32> to vector<16x32xf32>
    %8 = vector.extract_strided_slice %5 {offsets = [0, 1, 0], sizes = [4, 4, 32], strides = [1, 1, 1]} : vector<6x6x32xf32> to vector<4x4x32xf32>
    %9 = vector.shape_cast %8 : vector<4x4x32xf32> to vector<16x32xf32>
    %10 = vector.extract_strided_slice %5 {offsets = [0, 2, 0], sizes = [4, 4, 32], strides = [1, 1, 1]} : vector<6x6x32xf32> to vector<4x4x32xf32>
    %11 = vector.shape_cast %10 : vector<4x4x32xf32> to vector<16x32xf32>
    %12 = vector.extract_strided_slice %5 {offsets = [1, 0, 0], sizes = [4, 4, 32], strides = [1, 1, 1]} : vector<6x6x32xf32> to vector<4x4x32xf32>
    %13 = vector.shape_cast %12 : vector<4x4x32xf32> to vector<16x32xf32>
    %14 = vector.extract_strided_slice %5 {offsets = [1, 1, 0], sizes = [4, 4, 32], strides = [1, 1, 1]} : vector<6x6x32xf32> to vector<4x4x32xf32>
    %15 = vector.shape_cast %14 : vector<4x4x32xf32> to vector<16x32xf32>
    %16 = vector.extract_strided_slice %5 {offsets = [1, 2, 0], sizes = [4, 4, 32], strides = [1, 1, 1]} : vector<6x6x32xf32> to vector<4x4x32xf32>
    %17 = vector.shape_cast %16 : vector<4x4x32xf32> to vector<16x32xf32>
    %18 = vector.extract_strided_slice %5 {offsets = [2, 0, 0], sizes = [4, 4, 32], strides = [1, 1, 1]} : vector<6x6x32xf32> to vector<4x4x32xf32>
    %19 = vector.shape_cast %18 : vector<4x4x32xf32> to vector<16x32xf32>
    %20 = vector.extract_strided_slice %5 {offsets = [2, 1, 0], sizes = [4, 4, 32], strides = [1, 1, 1]} : vector<6x6x32xf32> to vector<4x4x32xf32>
    %21 = vector.shape_cast %20 : vector<4x4x32xf32> to vector<16x32xf32>
    %22 = vector.extract_strided_slice %5 {offsets = [2, 2, 0], sizes = [4, 4, 32], strides = [1, 1, 1]} : vector<6x6x32xf32> to vector<4x4x32xf32>
    %23 = vector.shape_cast %22 : vector<4x4x32xf32> to vector<16x32xf32>
    %24 = tpu.concatenate %7, %9, %11, %13, %15, %17, %19, %21, %23 in 1 : vector<16x32xf32>, vector<16x32xf32>, vector<16x32xf32>, vector<16x32xf32>, vector<16x32xf32>, vector<16x32xf32>, vector<16x32xf32>, vector<16x32xf32>, vector<16x32xf32> -> vector<16x288xf32>
    %25 = arith.truncf %24 : vector<16x288xf32> to vector<16x288xbf16>
    %c0_4 = arith.constant 0 : index
    %c0_5 = arith.constant 0 : index
    %26 = vector.load %arg2[%c0_4, %c0_5] : memref<288x16xbf16, #tpu.memory_space<vmem>>, vector<288x16xbf16>
    %cst_6 = arith.constant dense<0.000000e+00> : vector<16x16xf32>
    %27 = tpu.matmul %25, %26, %cst_6 {dimension_numbers = #tpu.dot_dimension_numbers<[1], [0], [0], [1], [0, 0, 1, 1], [], []>} : vector<16x288xbf16>, vector<288x16xbf16>, vector<16x16xf32> -> vector<16x16xf32>
    %c0_7 = arith.constant 0 : index
    %c0_8 = arith.constant 0 : index
    %28 = vector.load %arg3[%c0_7, %c0_8] : memref<1x16xf32, #tpu.memory_space<vmem>>, vector<1x16xf32>
    %29 = vector.shape_cast %28 : vector<1x16xf32> to vector<16xf32>
    %30 = vector.shape_cast %29 : vector<16xf32> to vector<1x16xf32>
    %31 = vector.broadcast %30 : vector<1x16xf32> to vector<16x16xf32>
    %32 = arith.addf %27, %31 : vector<16x16xf32>
    %cst_9 = arith.constant 0.000000e+00 : f32
    %33 = vector.broadcast %cst_9 : f32 to vector<16x16xf32>
    %34 = arith.cmpf oge, %32, %33 : vector<16x16xf32>
    %cst_10 = arith.constant 1.000000e-01 : f32
    %35 = vector.broadcast %cst_10 : f32 to vector<16x16xf32>
    %36 = arith.mulf %35, %32 : vector<16x16xf32>
    %37 = arith.select %34, %32, %36 : vector<16x16xi1>, vector<16x16xf32>
    %c0_11 = arith.constant 0 : index
    %c0_12 = arith.constant 0 : index
    %c0_13 = arith.constant 0 : index
    %38 = vector.load %arg4[%c0_11, %c0_12, %c0_13] : memref<1x16x16xf32, #tpu.memory_space<vmem>>, vector<1x16x16xf32>
    %39 = vector.shape_cast %38 : vector<1x16x16xf32> to vector<16x16xf32>
    %40 = vector.shape_cast %37 : vector<16x16xf32> to vector<1x16x16xf32>
    tpu.vector_store %arg4[%c0_11, %c0_12, %c0_13], %40 {strides = array<i32>} : memref<1x16x16xf32, #tpu.memory_space<vmem>>, vector<1x16x16xf32>,
    return
  }
  func.func @transform_0(%arg0: i32) -> (i32, i32, i32, i32) {
    %c0_i32 = arith.constant 0 : i32
    %c0_i32_0 = arith.constant 0 : i32
    %c0_i32_1 = arith.constant 0 : i32
    %c0_i32_2 = arith.constant 0 : i32
    return %arg0, %c0_i32, %c0_i32_0, %c0_i32_1 : i32, i32, i32, i32
  }
  func.func @transform_1(%arg0: i32) -> (i32, i32) {
    %c0_i32 = arith.constant 0 : i32
    %c0_i32_0 = arith.constant 0 : i32
    %c0_i32_1 = arith.constant 0 : i32
    return %c0_i32, %c0_i32_0 : i32, i32
  }
  func.func @transform_2(%arg0: i32) -> (i32, i32) {
    %c0_i32 = arith.constant 0 : i32
    %c0_i32_0 = arith.constant 0 : i32
    %c0_i32_1 = arith.constant 0 : i32
    return %c0_i32, %c0_i32_0 : i32, i32
  }
  func.func @transform_3(%arg0: i32) -> (i32, i32, i32) {
    %c0_i32 = arith.constant 0 : i32
    %c0_i32_0 = arith.constant 0 : i32
    %c0_i32_1 = arith.constant 0 : i32
    return %arg0, %c0_i32, %c0_i32_0 : i32, i32, i32
  }
}

</mosaic_0001>

<llo_original>
// kernel: tpu_custom_call.1
$region0: #{tpu_custom_call.1}
  #allocation0 [shape = 'u32[]', space=smem, size = 0x4, offset = 0x4, fixed_abs, tag = 'smem constant byte address 0x4 - core index']
  #allocation1 [shape = 'u32[144,128]{1,0:T(1,128)}', space=vmem, size = 0x12000, scoped, tag = 'internal scratch']
  %s0 = inlined_call_operand.vmem [shape: f32[2,4,4,32], index: 0, kind: input, shape index: {}]
  %s1 = inlined_call_operand.vmem [shape: bf16[288,16], index: 1, kind: input, shape index: {}]
  %s2 = inlined_call_operand.vmem [shape: f32[1,16], index: 2, kind: input, shape index: {}]
  %s3 = inlined_call_operand.hbm [shape: f32[2,16,16], index: 3, kind: output, shape index: {}]
  %s4 = sld [smem:[#allocation0]]
  $region45: #{tpu_custom_call.1} parent=0
    _
  %s6 = ssub.s32 1, %s4
  %s7 = scalar_select 0, %s6, %s4
  $region1: #{tpu_custom_call.1} parent=0
    #allocation2 [shape = 'u8[16384]{0}', space=vmem, size = 0x4000, scoped, tag = 'output window, operand 0']
    #allocation3 [shape = 's32[2]{0}', space=sflag, size = 0x8, scoped, tag = 'scoped memory for tpu_custom_call.1']
    %8 = vsyncpa [#allocation3], 0
    %s9 = scalar_lea.sflag [#allocation3], 1
    %10 = vsyncpa %s9, 0
    loop: start=0, step=1, limit=4
    $region2: #{tpu_custom_call.1} parent=1 // loop_pre_header
      _
    $region3: #{tpu_custom_call.1} parent=1 // loop_header
      %s12 = sphi 0, %s16
      %p13 = scmp.ge.s32.totalorder %s12, 4
      %s22 = sphi 0, %s24
      %s25 = sphi 0, %s22
      %s26 = sphi 0, %s25
      %s42 = sphi 0, %s26
      %s46 = sphi 0, %s46
      %s48 = sphi 0, %s46
      %s49 = sphi 0, %s48
      %s63 = sphi 0, %s49
      %s67 = sphi 0, %s67
      %s69 = sphi 0, %s67
      %s70 = sphi 0, %s69
      %s84 = sphi 0, %s70
      %s90 = sphi 0, %s92
      %s93 = sphi 0, %s90
      %s94 = sphi 0, %s93
      %s110 = sphi 0, %s94
    $region4: #{tpu_custom_call.1} parent=1 // loop_header_branch
      %15 = sbr.rel (%p13) target = $region8
    $region5: #{tpu_custom_call.1} parent=1 // loop_body
      %s17 = ssub.s32 %s12, 1
      %s18 = ssub.s32 %s12, 2
      %s19 = sadd.s32 %s12, 1
      %s20 = ssub.s32 %s12, %s19
      %p21 = scmp.eq.s32.totalorder %s20, 0
      %s23 = sadd.s32 %s22, 1
      %s24 = scalar_select %p21, %s22, %s23
      %p27 = pneg %p21
      %p28 = scmp.eq.s32.totalorder %s12, 1
      %p29 = por %p27, %p28
      %p30 = scmp.ne.s32.totalorder %s22, %s25
      %p31 = scmp.eq.s32.totalorder %s12, 0
      %p32 = por %p30, %p31
      %p33 = scmp.ne.s32.totalorder %s22, %s25
      %p34 = scmp.eq.s32.totalorder %s17, 1
      %p35 = por %p33, %p34
      %p36 = scmp.ne.s32.totalorder %s25, %s26
      %p37 = scmp.eq.s32.totalorder %s17, 0
      %p38 = por %p36, %p37
      %p39 = scmp.ne.s32.totalorder %s25, %s26
      %p40 = scmp.eq.s32.totalorder %s18, 1
      %p41 = por %p39, %p40
      %p43 = scmp.ne.s32.totalorder %s26, %s42
      %p44 = scmp.eq.s32.totalorder %s18, 0
      %p45 = por %p43, %p44
      %s47 = sadd.s32 %s46, 1
      %p50 = scmp.eq.s32.totalorder %s12, 1
      %p51 = scmp.ne.s32.totalorder %s46, %s48
      %p52 = scmp.eq.s32.totalorder %s12, 0
      %p53 = por %p51, %p52
      %p54 = scmp.ne.s32.totalorder %s46, %s48
      %p55 = scmp.eq.s32.totalorder %s17, 1
      %p56 = por %p54, %p55
      %p57 = scmp.ne.s32.totalorder %s48, %s49
      %p58 = scmp.eq.s32.totalorder %s17, 0
      %p59 = por %p57, %p58
      %p60 = scmp.ne.s32.totalorder %s48, %s49
      %p61 = scmp.eq.s32.totalorder %s18, 1
      %p62 = por %p60, %p61
      %p64 = scmp.ne.s32.totalorder %s49, %s63
      %p65 = scmp.eq.s32.totalorder %s18, 0
      %p66 = por %p64, %p65
      %s68 = sadd.s32 %s67, 1
      %p71 = scmp.eq.s32.totalorder %s12, 1
      %p72 = scmp.ne.s32.totalorder %s67, %s69
      %p73 = scmp.eq.s32.totalorder %s12, 0
      %p74 = por %p72, %p73
      %p75 = scmp.ne.s32.totalorder %s67, %s69
      %p76 = scmp.eq.s32.totalorder %s17, 1
      %p77 = por %p75, %p76
      %p78 = scmp.ne.s32.totalorder %s69, %s70
      %p79 = scmp.eq.s32.totalorder %s17, 0
      %p80 = por %p78, %p79
      %p81 = scmp.ne.s32.totalorder %s69, %s70
      %p82 = scmp.eq.s32.totalorder %s18, 1
      %p83 = por %p81, %p82
      %p85 = scmp.ne.s32.totalorder %s70, %s84
      %p86 = scmp.eq.s32.totalorder %s18, 0
      %p87 = por %p85, %p86
      %s88 = ssub.s32 %s12, %s19
      %p89 = scmp.eq.s32.totalorder %s88, 0
      %s91 = sadd.s32 %s90, 1
      %s92 = scalar_select %p89, %s90, %s91
      %p95 = pneg %p89
      %p96 = scmp.eq.s32.totalorder %s12, 1
      %p97 = por %p95, %p96
      %p98 = scmp.ne.s32.totalorder %s90, %s93
      %p99 = scmp.eq.s32.totalorder %s12, 0
      %p100 = por %p98, %p99
      %p101 = scmp.ne.s32.totalorder %s90, %s93
      %p102 = scmp.eq.s32.totalorder %s17, 1
      %p103 = por %p101, %p102
      %p104 = scmp.ne.s32.totalorder %s93, %s94
      %p105 = scmp.eq.s32.totalorder %s17, 0
      %p106 = por %p104, %p105
      %p107 = scmp.ne.s32.totalorder %s93, %s94
      %p108 = scmp.eq.s32.totalorder %s18, 1
      %p109 = por %p107, %p108
      %p111 = scmp.ne.s32.totalorder %s94, %s110
      %p112 = scmp.eq.s32.totalorder %s18, 0
      %p113 = por %p111, %p112
      %p114 = scmp.le.s32.totalorder 1, %s12
      %p115 = scmp.lt.s32.totalorder %s12, 3
      %p116 = pnand %p114, %p115
      %p117 = pneg %p116
      // Predicated region
      $region9: #{tpu_custom_call.1} parent=5 // pred_check
        _
      $region10: #{tpu_custom_call.1} parent=5 // pred_check_branch
        %119 = sbr.rel (%p116) target = $region12
      $region11: #{tpu_custom_call.1} parent=5 // pred_region
        %s120 = ssub.s32 %s12, 1
        // Predicated region
        $region13: #{tpu_custom_call.1} parent=11 // pred_check
          %p121 = pneg %p59
        $region14: #{tpu_custom_call.1} parent=11 // pred_check_branch
          %123 = sbr.rel (%p121) target = $region16
        $region15: #{tpu_custom_call.1} parent=11 // pred_region
          _
        $region16: #{tpu_custom_call.1} parent=11 // pred_fallthru
          _
        // Predicated region
        $region17: #{tpu_custom_call.1} parent=11 // pred_check
          %p124 = pneg %p80
        $region18: #{tpu_custom_call.1} parent=11 // pred_check_branch
          %126 = sbr.rel (%p124) target = $region20
        $region19: #{tpu_custom_call.1} parent=11 // pred_region
          _
        $region20: #{tpu_custom_call.1} parent=11 // pred_fallthru
          _
      $region12: #{tpu_custom_call.1} parent=5 // pred_fallthru
        _
      %p127 = scmp.lt.s32.totalorder %s12, 2
      // Predicated region
      $region21: #{tpu_custom_call.1} parent=5 // pred_check
        %p128 = pneg %p127
      $region22: #{tpu_custom_call.1} parent=5 // pred_check_branch
        %130 = sbr.rel (%p128) target = $region24
      $region23: #{tpu_custom_call.1} parent=5 // pred_region
        // Predicated region
        $region25: #{tpu_custom_call.1} parent=23 // pred_check
          %p131 = pneg %p32
        $region26: #{tpu_custom_call.1} parent=23 // pred_check_branch
          %133 = sbr.rel (%p131) target = $region28
        $region27: #{tpu_custom_call.1} parent=23 // pred_region
          %p134 = scmp.lt.s32.totalorder %s12, 1
          %s135 = scalar_select %p134, %s12, 1
          %s136 = smul.addr %s135, 4
          %s137 = smul.addr %s136, 4
          %s138 = scalar_lea.vmem %s0, %s137
        $region28: #{tpu_custom_call.1} parent=23 // pred_fallthru
          _
      $region24: #{tpu_custom_call.1} parent=5 // pred_fallthru
        _
      %p139 = scmp.le.s32.totalorder 1, %s12
      %p140 = scmp.lt.s32.totalorder %s12, 3
      %p141 = pnand %p139, %p140
      %p142 = pneg %p141
      // Predicated region
      $region29: #{tpu_custom_call.1} parent=5 // pred_check
        _
      $region30: #{tpu_custom_call.1} parent=5 // pred_check_branch
        %144 = sbr.rel (%p141) target = $region32
      $region31: #{tpu_custom_call.1} parent=5 // pred_region
        %s145 = ssub.s32 %s12, 1
        %p146 = scmp.lt.s32.totalorder %s17, 1
        %s147 = scalar_select %p146, %s17, 1
        %s148 = smul.addr %s147, 4
        %s149 = smul.addr %s148, 4
        %s150 = scalar_lea.vmem %s0, %s149
        %p151 = pneg %p38
        %p152 = pneg %p35
        %p153 = pneg %p59
        %p154 = pneg %p56
        %p155 = pneg %p80
        %p156 = pneg %p77
        %p157 = pneg %p106
        %p158 = pneg %p103
        %s159 = sand.u32 %s93, 1
        %s160 = scalar_lea.sflag [#allocation3], %s159
        %s161 = sand.u32 %s93, 1
        %s162 = smul.addr %s161, 16
        %s163 = scalar_lea.vmem [#allocation2], %s162
        %p164 = scmp.lt.s32.totalorder %s17, 1
        %s165 = scalar_select %p164, %s17, 1
        %s166 = smul.addr %s165, 4
        %s167 = smul.addr %s166, 4
        %s168 = scalar_lea.vmem %s0, %s167
        %v170 = vld [vmem:[%s168] sm:$0xf]
        %v171 = vld [vmem:[%s168 + $0x4] sm:$0xf]
        %v172 = vld [vmem:[%s168 + $0x8] sm:$0xf]
        %v173 = vld [vmem:[%s168 + $0xc] sm:$0xf]
        %v178 = vrot.slane %v170, 7
        %v179 = vrot.slane %v171, 7
        %v180 = vrot.slane %v172, 7
        %v181 = vrot.slane %v173, 7
        %vm186 = vcmask 1040384
        %v187 = vsel %vm186, 0.0, %v178
        %v188 = vsel %vm186, 0.0, %v179
        %v189 = vsel %vm186, 0.0, %v180
        %v190 = vsel %vm186, 0.0, %v181
        %vm191 = vcmask 1044480
        %v192 = vsel %vm191, %v187, 0.0
        %v193 = vsel %vm191, %v188, 0.0
        %v194 = vsel %vm191, %v189, 0.0
        %v195 = vsel %vm191, %v190, 0.0
        %v200 = vcombine.high 0.0, 0.0
        %v201 = vcombine.high %v192, %v192
        %v202 = vcombine.high %v193, %v193
        %v203 = vcombine.high %v194, %v194
        %vm204 = vcmask 1042432
        %vm205 = vcmask 1046532
        %vm206 = vmor %vm204, %vm205
        %v207 = vrot.slane 0.0, 5
        %v208 = vrot.slane %v207, 4
        %v209 = vrot.slane %v200, 5
        %v210 = vsel %vm206, %v208, %v209
        %v211 = vrot.slane %v192, 5
        %v212 = vrot.slane %v211, 4
        %v213 = vrot.slane %v201, 5
        %v214 = vsel %vm206, %v212, %v213
        %v215 = vrot.slane %v193, 5
        %v216 = vrot.slane %v215, 4
        %v217 = vrot.slane %v202, 5
        %v218 = vsel %vm206, %v216, %v217
        %v219 = vrot.slane %v194, 5
        %v220 = vrot.slane %v219, 4
        %v221 = vrot.slane %v203, 5
        %v222 = vsel %vm206, %v220, %v221
        %vm223 = vcmask 1041408
        %vm224 = vcmask 1045508
        %vm225 = vmor %vm223, %vm224
        %v226 = vrot.slane 0.0, 6
        %v227 = vrot.slane %v226, 4
        %v228 = vrot.slane %v200, 6
        %v229 = vsel %vm225, %v227, %v228
        %v230 = vrot.slane %v192, 6
        %v231 = vrot.slane %v230, 4
        %v232 = vrot.slane %v201, 6
        %v233 = vsel %vm225, %v231, %v232
        %v234 = vrot.slane %v193, 6
        %v235 = vrot.slane %v234, 4
        %v236 = vrot.slane %v202, 6
        %v237 = vsel %vm225, %v235, %v236
        %v238 = vrot.slane %v194, 6
        %v239 = vrot.slane %v238, 4
        %v240 = vrot.slane %v203, 6
        %v241 = vsel %vm225, %v239, %v240
        %v243 = vcombine.high %v195, %v195
        %v244 = vrot.slane %v195, 5
        %v245 = vrot.slane %v244, 4
        %v246 = vrot.slane %v243, 5
        %v247 = vsel %vm206, %v245, %v246
        %v248 = vrot.slane %v195, 6
        %v249 = vrot.slane %v248, 4
        %v250 = vrot.slane %v243, 6
        %v251 = vsel %vm225, %v249, %v250
        %v252 = vcombine.low 0.0, %v192
        %v253 = vcombine.low %v193, %v194
        %v256 = vcombine.low %v210, %v214
        %v257 = vcombine.low %v218, %v222
        %258 = vrot.lane.b32.xlu0 %v256, 32
        %v259 = vpop.permute.xlu0 %258
        %260 = vrot.lane.b32.xlu0 %v257, 32
        %v261 = vpop.permute.xlu0 %260
        %v264 = vcombine.low %v229, %v233
        %v265 = vcombine.low %v237, %v241
        %266 = vrot.lane.b32.xlu0 %v264, 64
        %v267 = vpop.permute.xlu0 %266
        %268 = vrot.lane.b32.xlu0 %v265, 64
        %v269 = vpop.permute.xlu0 %268
        %v272 = vcombine.low %v192, %v193
        %v273 = vcombine.low %v194, %v195
        %274 = vrot.lane.b32.xlu0 %v272, 96
        %v275 = vpop.permute.xlu0 %274
        %276 = vrot.lane.b32.xlu0 %v273, 96
        %v277 = vpop.permute.xlu0 %276
        %v280 = vcombine.low %v214, %v218
        %v281 = vcombine.low %v222, %v247
        %v284 = vcombine.low %v233, %v237
        %v285 = vcombine.low %v241, %v251
        %286 = vrot.lane.b32.xlu0 %v284, 32
        %v287 = vpop.permute.xlu0 %286
        %288 = vrot.lane.b32.xlu0 %v285, 32
        %v289 = vpop.permute.xlu0 %288
        %v292 = vcombine.low %v195, 0.0
        %293 = vrot.lane.b32.xlu0 %v253, 64
        %v294 = vpop.permute.xlu0 %293
        %295 = vrot.lane.b32.xlu0 %v292, 64
        %v296 = vpop.permute.xlu0 %295
        %v299 = vcombine.low %v247, %v210
        %300 = vrot.lane.b32.xlu0 %v257, 96
        %v301 = vpop.permute.xlu0 %300
        %302 = vrot.lane.b32.xlu0 %v299, 96
        %v303 = vpop.permute.xlu0 %302
        %v306 = vcombine.low %v251, %v229
        %vm309 = vcmask 261120
        %v310 = vsel %vm309, %v252, %v259
        %v311 = vsel %vm309, %v253, %v261
        %vm312 = vcmask 523264
        %v313 = vsel %vm312, %v310, %v267
        %v314 = vsel %vm312, %v311, %v269
        %vm315 = vcmask 785408
        %v316 = vsel %vm315, %v313, %v275
        %v317 = vsel %vm315, %v314, %v277
        %v318 = vsel %vm309, %v280, %v287
        %v319 = vsel %vm309, %v281, %v289
        %v320 = vsel %vm312, %v318, %v294
        %v321 = vsel %vm312, %v319, %v296
        %v322 = vsel %vm315, %v320, %v301
        %v323 = vsel %vm315, %v321, %v303
        %v324 = vpack.c.bf16 %v317, %v316
        %v325 = vpack.c.bf16 %v323, %v322
        %v326 = vpack.c.bf16 %v306, %v265
        %v327 = vld [vmem:[%s1] sm:$0xf]
        %v328 = vld [vmem:[%s1 + $0x4] sm:$0xf]
        %v329 = vld [vmem:[%s1 + $0x8] sm:$0xf]
        %v330 = vld [vmem:[%s1 + $0xc] sm:$0xf]
        %v331 = vld [vmem:[%s1 + $0x10] sm:$0xf]
        %v332 = vld [vmem:[%s1 + $0x14] sm:$0xf]
        %v333 = vld [vmem:[%s1 + $0x18] sm:$0xf]
        %v334 = vld [vmem:[%s1 + $0x1c] sm:$0xf]
        %v335 = vld [vmem:[%s1 + $0x20] sm:$0xf]
        %v336 = vld [vmem:[%s1 + $0x24] sm:$0xf]
        %v337 = vld [vmem:[%s1 + $0x28] sm:$0xf]
        %v338 = vld [vmem:[%s1 + $0x2c] sm:$0xf]
        %v339 = vld [vmem:[%s1 + $0x30] sm:$0xf]
        %v340 = vld [vmem:[%s1 + $0x34] sm:$0xf]
        %v341 = vld [vmem:[%s1 + $0x38] sm:$0xf]
        %v342 = vld [vmem:[%s1 + $0x3c] sm:$0xf]
        %v343 = vld [vmem:[%s1 + $0x40] sm:$0xf]
        %v344 = vld [vmem:[%s1 + $0x44] sm:$0xf]
        %v345 = vld [vmem:[%s1 + $0x48] sm:$0xf]
        %v346 = vld [vmem:[%s1 + $0x4c] sm:$0xf]
        %v347 = vld [vmem:[%s1 + $0x50] sm:$0xf]
        %v348 = vld [vmem:[%s1 + $0x54] sm:$0xf]
        %v349 = vld [vmem:[%s1 + $0x58] sm:$0xf]
        %v350 = vld [vmem:[%s1 + $0x5c] sm:$0xf]
        %v351 = vld [vmem:[%s1 + $0x60] sm:$0xf]
        %v352 = vld [vmem:[%s1 + $0x64] sm:$0xf]
        %v353 = vld [vmem:[%s1 + $0x68] sm:$0xf]
        %v354 = vld [vmem:[%s1 + $0x6c] sm:$0xf]
        %v355 = vld [vmem:[%s1 + $0x70] sm:$0xf]
        %v356 = vld [vmem:[%s1 + $0x74] sm:$0xf]
        %v357 = vld [vmem:[%s1 + $0x78] sm:$0xf]
        %v358 = vld [vmem:[%s1 + $0x7c] sm:$0xf]
        %v359 = vld [vmem:[%s1 + $0x80] sm:$0xf]
        %v360 = vld [vmem:[%s1 + $0x84] sm:$0xf]
        %v361 = vld [vmem:[%s1 + $0x88] sm:$0xf]
        %v362 = vld [vmem:[%s1 + $0x8c] sm:$0xf]
        %v363 = vld [vmem:[%s2] sm:$0x1]
        %v365 = vlaneseq
        %v366 = vshrl.u32 %v365, 7
        %v367 = vsub.s32 0, %v366
        %v368 = vrot.slane %v363, %v367
        %v406 = vunpack.c.l.b16 %v327
        %v407 = vunpack.c.l.b16 %v328
        %v408 = vunpack.c.l.b16 %v329
        %v409 = vunpack.c.l.b16 %v330
        %v410 = vunpack.c.l.b16 %v331
        %v411 = vunpack.c.l.b16 %v332
        %v412 = vunpack.c.l.b16 %v333
        %v413 = vunpack.c.l.b16 %v334
        %v414 = vunpack.c.l.b16 %v335
        %v415 = vunpack.c.l.b16 %v336
        %v416 = vunpack.c.l.b16 %v337
        %v417 = vunpack.c.l.b16 %v338
        %v418 = vunpack.c.l.b16 %v339
        %v419 = vunpack.c.l.b16 %v340
        %v420 = vunpack.c.l.b16 %v341
        %v421 = vunpack.c.l.b16 %v342
        %v422 = vunpack.c.l.b16 %v343
        %v423 = vunpack.c.l.b16 %v344
        %v424 = vunpack.c.l.b16 %v345
        %v425 = vunpack.c.l.b16 %v346
        %v426 = vunpack.c.l.b16 %v347
        %v427 = vunpack.c.l.b16 %v348
        %v428 = vunpack.c.l.b16 %v349
        %v429 = vunpack.c.l.b16 %v350
        %v430 = vunpack.c.l.b16 %v351
        %v431 = vunpack.c.l.b16 %v352
        %v432 = vunpack.c.l.b16 %v353
        %v433 = vunpack.c.l.b16 %v354
        %v434 = vunpack.c.l.b16 %v355
        %v435 = vunpack.c.l.b16 %v356
        %v436 = vunpack.c.l.b16 %v357
        %v437 = vunpack.c.l.b16 %v358
        %v438 = vunpack.c.l.b16 %v359
        %v439 = vunpack.c.l.b16 %v360
        %v440 = vunpack.c.l.b16 %v361
        %v441 = vunpack.c.l.b16 %v362
        %v442 = vpack.c.b16 %v407, %v406
        %v443 = vpack.c.b16 %v409, %v408
        %v444 = vpack.c.b16 %v411, %v410
        %v445 = vpack.c.b16 %v413, %v412
        %v446 = vpack.c.b16 %v415, %v414
        %v447 = vpack.c.b16 %v417, %v416
        %v448 = vpack.c.b16 %v419, %v418
        %v449 = vpack.c.b16 %v421, %v420
        %v450 = vpack.c.b16 %v423, %v422
        %v451 = vpack.c.b16 %v425, %v424
        %v452 = vpack.c.b16 %v427, %v426
        %v453 = vpack.c.b16 %v429, %v428
        %v454 = vpack.c.b16 %v431, %v430
        %v455 = vpack.c.b16 %v433, %v432
        %v456 = vpack.c.b16 %v435, %v434
        %v457 = vpack.c.b16 %v437, %v436
        %v458 = vpack.c.b16 %v439, %v438
        %v459 = vpack.c.b16 %v441, %v440
        %v479 = vsel %vm309, %v326, 0
        %481 = vmatprep.subr.bf16.mxu0 0
        %482 = vmatpush1.bf16.msra.mxu0 %v442
        %483 = vmatprep.subr.bf16.mxu0 0
        %484 = vmatpush1.bf16.msra.mxu0 %v443
        %485 = vmatprep.subr.bf16.mxu0 0
        %486 = vmatpush1.bf16.msra.mxu0 %v444
        %487 = vmatprep.subr.bf16.mxu0 0
        %488 = vmatpush1.bf16.msra.mxu0 %v445
        %489 = vmatprep.subr.bf16.mxu0 0
        %490 = vmatpush1.bf16.msra.mxu0 %v446
        %491 = vmatprep.subr.bf16.mxu0 0
        %492 = vmatpush1.bf16.msra.mxu0 %v447
        %493 = vmatprep.subr.bf16.mxu0 0
        %494 = vmatpush1.bf16.msra.mxu0 %v448
        %495 = vmatprep.subr.bf16.mxu0 0
        %496 = vmatpush1.bf16.msra.mxu0 %v449
        %497 = vmatprep.subr.bf16.mxu0 0
        %498 = vmatpush1.bf16.msra.mxu0 %v450
        %499 = vmatprep.subr.bf16.mxu0 0
        %500 = vmatpush1.bf16.msra.mxu0 %v451
        %501 = vmatprep.subr.bf16.mxu0 0
        %502 = vmatpush1.bf16.msra.mxu0 %v452
        %503 = vmatprep.subr.bf16.mxu0 0
        %504 = vmatpush1.bf16.msra.mxu0 %v453
        %505 = vmatprep.subr.bf16.mxu0 0
        %506 = vmatpush1.bf16.msra.mxu0 %v454
        %507 = vmatprep.subr.bf16.mxu0 0
        %508 = vmatpush1.bf16.msra.mxu0 %v455
        %509 = vmatprep.subr.bf16.mxu0 0
        %510 = vmatpush1.bf16.msra.mxu0 %v456
        %511 = vmatprep.subr.bf16.mxu0 0
        %512 = vmatpush1.bf16.msra.mxu0 %v457
        %513 = vmatprep.mubr.bf16.mxu0 %v325
        %514 = vmatmul.mubr.bf16.gmra.mrb[0].mxu0 %v324
        %v515 = vpop.f32.mrb[0].mxu0
        %v516 = vadd.f32 %v368, %v515
        %v517 = vpop.f32.mrb[0].mxu0
        %v518 = vpop.f32.mrb[0].mxu0
        %v519 = vadd.f32 %v368, %v518
        %v520 = vpop.f32.mrb[0].mxu0
        %521 = vdwg.mxu0
        %522 = vmatprep.subr.bf16.mxu0 0
        %523 = vmatpush1.bf16.msra.mxu0 %v458
        %524 = vmatprep.subr.bf16.mxu0 0
        %525 = vmatpush1.bf16.msra.mxu0 %v459
        %526 = vmatprep.subr.bf16.mxu0 0
        %527 = vmatpush1.bf16.msra.mxu0 0
        %528 = vmatprep.subr.bf16.mxu0 0
        %529 = vmatpush1.bf16.msra.mxu0 0
        %530 = vmatprep.subr.bf16.mxu0 0
        %531 = vmatpush1.bf16.msra.mxu0 0
        %532 = vmatprep.subr.bf16.mxu0 0
        %533 = vmatpush1.bf16.msra.mxu0 0
        %534 = vmatprep.subr.bf16.mxu0 0
        %535 = vmatpush1.bf16.msra.mxu0 0
        %536 = vmatprep.subr.bf16.mxu0 0
        %537 = vmatpush1.bf16.msra.mxu0 0
        %538 = vmatprep.subr.bf16.mxu0 0
        %539 = vmatpush1.bf16.msra.mxu0 0
        %540 = vmatprep.subr.bf16.mxu0 0
        %541 = vmatpush1.bf16.msra.mxu0 0
        %542 = vmatprep.subr.bf16.mxu0 0
        %543 = vmatpush1.bf16.msra.mxu0 0
        %544 = vmatprep.subr.bf16.mxu0 0
        %545 = vmatpush1.bf16.msra.mxu0 0
        %546 = vmatprep.subr.bf16.mxu0 0
        %547 = vmatpush1.bf16.msra.mxu0 0
        %548 = vmatprep.subr.bf16.mxu0 0
        %549 = vmatpush1.bf16.msra.mxu0 0
        %550 = vmatprep.subr.bf16.mxu0 0
        %551 = vmatpush1.bf16.msra.mxu0 0
        %552 = vmatprep.subr.bf16.mxu0 0
        %553 = vmatpush1.bf16.msra.mxu0 0
        %554 = vmatprep.mubr.bf16.mxu0 0
        %555 = vmatmul.mubr.bf16.gmra.mrb[0].mxu0 %v479
        %v556 = vpop.f32.mrb[0].mxu0
        %v557 = vadd.f32 %v516, %v556
        %v558 = vpop.f32.mrb[0].mxu0
        %v559 = vpop.f32.mrb[0].mxu0
        %v560 = vadd.f32 %v519, %v559
        %v561 = vpop.f32.mrb[0].mxu0
        %562 = vdwg.mxu0
        %vm563 = vcmp.ge.f32.partialorder %v557, 0.0
        %vm564 = vcmp.ge.f32.partialorder %v560, 0.0
        %v565 = vmul.f32 %v557, 0.1
        %v566 = vmul.f32 %v560, 0.1
        %v567 = vsel %vm563, %v557, %v565
        %v568 = vsel %vm564, %v560, %v566
        %vm569 = vcmask 130048
        %570 = vst.msk [vmem:[%s163] sm:$0xff] %vm569, %v567
        %571 = vst.msk [vmem:[%s163 + $0x8] sm:$0xff] %vm569, %v568
        %s572 = sand.u32 %s93, 1
        %s573 = scalar_lea.sflag [#allocation3], %s572
        %s574 = sand.u32 %s93, 1
        %s575 = smul.addr %s574, 16
        %s576 = scalar_lea.vmem [#allocation2], %s575
        // Predicated region
        $region33: #{tpu_custom_call.1} parent=31 // pred_check
          %p577 = pneg %p103
        $region34: #{tpu_custom_call.1} parent=31 // pred_check_branch
          %579 = sbr.rel (%p577) target = $region36
        $region35: #{tpu_custom_call.1} parent=31 // pred_region
          %s581 = ssub.s32 256, 256
          %582 = vsyncadd %s573, %s581
          %s583 = smul.addr %s17, 2
          %s584 = smul.addr %s583, 128
          %s585 = scalar_lea.hbm %s3, %s584
          %s586 = sshll.u32 %s576, 4
          %s587 = int_to_ptr.vmem [resolvable:$true] %s586
          %592 = dma.vmem_to_hbm [thread:$0]  %s587, 256, %s585, %s573, 128, 128, 8
        $region36: #{tpu_custom_call.1} parent=31 // pred_fallthru
          _
      $region32: #{tpu_custom_call.1} parent=5 // pred_fallthru
        _
      %p593 = scmp.le.s32.totalorder 2, %s12
      // Predicated region
      $region37: #{tpu_custom_call.1} parent=5 // pred_check
        %p594 = pneg %p593
      $region38: #{tpu_custom_call.1} parent=5 // pred_check_branch
        %596 = sbr.rel (%p594) target = $region40
      $region39: #{tpu_custom_call.1} parent=5 // pred_region
        %s597 = ssub.s32 %s12, 2
        // Predicated region
        $region41: #{tpu_custom_call.1} parent=39 // pred_check
          %p598 = pneg %p109
        $region42: #{tpu_custom_call.1} parent=39 // pred_check_branch
          %600 = sbr.rel (%p598) target = $region44
        $region43: #{tpu_custom_call.1} parent=39 // pred_region
          %s601 = sand.u32 %s94, 1
          %s602 = scalar_lea.sflag [#allocation3], %s601
          %s603 = sand.u32 %s94, 1
          %s604 = smul.addr %s603, 16
          %s605 = scalar_lea.vmem [#allocation2], %s604
          %606 = dma.done %s602, 256
        $region44: #{tpu_custom_call.1} parent=39 // pred_fallthru
          _
      $region40: #{tpu_custom_call.1} parent=5 // pred_fallthru
        _
    $region6: #{tpu_custom_call.1} parent=1 // loop_footer
      %s16 = sadd.s32 1, %s12
    $region7: #{tpu_custom_call.1} parent=1 // loop_footer_branch
      %11 = sbr.rel target = $region3
    $region8: #{tpu_custom_call.1} parent=1 // loop_exit
      _
    %607 = vsyncpa [#allocation3], 1
    %s608 = scalar_lea.sflag [#allocation3], 1
    %609 = vsyncpa %s608, 1

</llo_original>
